<compile_context>
chip_gen: v7x
topology: tpu7x:2x2x1
jax: 0.10.0
libtpu: 0.0.40
codegen_flags: <defaults>
</compile_context>

<pallas_src>
import functools

import jax
import jax.numpy as jnp
from jax.experimental import pallas as pl
from jax.experimental.pallas import tpu as pltpu

EPS = 1e-5      # nn.BatchNorm1d default eps
TB_MAX = 1024   # upper bound on rows per grid step


def _round_up(n, m):
    return ((n + m - 1) // m) * m


def _pick_tile(batch):
    """Large tiles to amortize per-step overhead, but keep >= 2 grid steps
    when the batch allows so v7x's two TensorCores both get work."""
    b8 = _round_up(batch, 8)
    if b8 <= 128:
        return b8                       # whole (tiny) batch in one tile
    half = _round_up((b8 + 1) // 2, 8)  # aim for 2 tiles
    return max(128, min(TB_MAX, half))


def _fused_mlp_kernel(dims, matmul_dtype, *refs):
    """refs = (x_ref, W_0 .. W_{n-1}, slab_ref, out_ref).

    dims = (input_size, *hidden_sizes); block i maps dims[i] -> dims[i+1].
    slab rows: [0..n-1] folded Linear+BN biases, [n] output-head weight row,
    [n+1] output-head bias (element 0).  Rows padded to max(hidden_sizes).
    """
    n_blocks = len(dims) - 1
    x_ref = refs[0]
    w_refs = refs[1:1 + n_blocks]
    slab_ref = refs[1 + n_blocks]
    out_ref = refs[2 + n_blocks]

    slab = slab_ref[...]                # tiny: one load, slice as values
    h = x_ref[...]
    for i in range(n_blocks):
        in_f, out_f = dims[i], dims[i + 1]
        lhs = h if matmul_dtype == jnp.float32 else h.astype(matmul_dtype)
        # Linear with BN folded into W'/b' (eval-mode running statistics).
        y = jnp.dot(lhs, w_refs[i][...], preferred_element_type=jnp.float32)
        y = y + slab[i:i + 1, :out_f]
        y = jnp.maximum(y, 0.0)         # ReLU
        # TODO(synk): nn.Dropout is the identity here (eval-mode semantics).
        if i > 0 and in_f == out_f:     # residual, shape-gated like PyTorch
            y = y + h * 0.1
        h = y

    # 1-wide output head as a VPU-mul + lane reduction (avoids a near-empty
    # MXU pass), stored lane-dense as a (1, 1, TB) row.
    w_out = slab[n_blocks:n_blocks + 1, :dims[-1]]            # (1, H_last)
    b_out = slab[n_blocks + 1:n_blocks + 2, 0:1]              # (1, 1)
    row = jnp.sum(h * w_out, axis=-1)                         # (TB,)
    out_ref[...] = row.reshape(1, 1, -1) + b_out.reshape(1, 1, 1)


def traffic_nn_forward(x, params, hidden_sizes, *, matmul_dtype=jnp.float32):
    hidden_sizes = list(hidden_sizes)
    n_blocks = len(hidden_sizes)
    B, F = x.shape
    dims = (F, *hidden_sizes)
    H_max = max(hidden_sizes)

    # ---- host-side BN folding + parameter packing ----
    weights = []
    slab = jnp.zeros((n_blocks + 2, H_max), jnp.float32)
    for i, blk in enumerate(params["blocks"]):
        scale = blk["gamma"] * jax.lax.rsqrt(blk["var"] + EPS)    # (1, H_i)
        w_f = (blk["W"] * scale).astype(matmul_dtype)             # (in, H_i)
        b_f = (blk["b"] - blk["mean"]) * scale + blk["beta"]      # (1, H_i)
        weights.append(w_f)
        slab = slab.at[i, :hidden_sizes[i]].set(b_f[0])
    slab = slab.at[n_blocks, :hidden_sizes[-1]].set(params["W_out"][:, 0])
    slab = slab.at[n_blocks + 1, 0].set(params["b_out"][0, 0])

    # ---- batch tiling ----
    tb = _pick_tile(B)
    nb = pl.cdiv(B, tb)
    B_pad = nb * tb
    if B_pad != B:
        x = jnp.pad(x, ((0, B_pad - B), (0, 0)))

    in_specs = [pl.BlockSpec((tb, F), lambda i: (i, 0))]
    for w in weights:
        # Full-shape block + constant index_map -> weight stays resident in
        # VMEM across batch tiles; its DMA happens once, not per grid step.
        in_specs.append(pl.BlockSpec(w.shape, lambda i: (0, 0)))
    in_specs.append(pl.BlockSpec(slab.shape, lambda i: (0, 0)))

    out = pl.pallas_call(
        functools.partial(_fused_mlp_kernel, dims, matmul_dtype),
        out_shape=jax.ShapeDtypeStruct((nb, 1, tb), jnp.float32),
        grid=(nb,),
        in_specs=in_specs,
        # Lane-dense output block: last dim = tb (>=128 whenever B >= 128).
        out_specs=pl.BlockSpec((1, 1, tb), lambda i: (i, 0, 0)),
        compiler_params=pltpu.CompilerParams(
            dimension_semantics=("parallel",)),
    )(x, *weights, slab)

    # matches PyTorch `.squeeze()` on the [B, 1] output -> [B]
    return out.reshape(B_pad)[:B]


def init_params(key, input_size, hidden_sizes):
    """Deterministic parameter init (shapes match the PyTorch module)."""
    dims = [input_size] + list(hidden_sizes)
    blocks = []
    for i in range(len(hidden_sizes)):
        fan_in, fan_out = dims[i], dims[i + 1]
        key, k1, k2, k3, k4, k5, k6 = jax.random.split(key, 7)
        bound = 1.0 / jnp.sqrt(jnp.float32(fan_in))
        blocks.append(dict(
            W=jax.random.uniform(k1, (fan_in, fan_out), jnp.float32, -bound, bound),
            b=jax.random.uniform(k2, (1, fan_out), jnp.float32, -bound, bound),
            gamma=1.0 + 0.1 * jax.random.normal(k3, (1, fan_out), jnp.float32),
            beta=0.1 * jax.random.normal(k4, (1, fan_out), jnp.float32),
            mean=0.05 * jax.random.normal(k5, (1, fan_out), jnp.float32),
            var=1.0 + 0.1 * jax.random.uniform(k6, (1, fan_out), jnp.float32),
        ))
    key, k1, k2 = jax.random.split(key, 3)
    fan_in = hidden_sizes[-1]
    bound = 1.0 / jnp.sqrt(jnp.float32(fan_in))
    W_out = jax.random.uniform(k1, (fan_in, 1), jnp.float32, -bound, bound)
    b_out = jax.random.uniform(k2, (1, 1), jnp.float32, -bound, bound)
    return dict(blocks=blocks, W_out=W_out, b_out=b_out)


def reference_forward(x, params, hidden_sizes):
    """Pure-jnp reference mirroring the PyTorch forward (eval mode, no fold)."""
    h = x
    for i, blk in enumerate(params["blocks"]):
        y = jnp.dot(h, blk["W"], preferred_element_type=jnp.float32) + blk["b"]
        y = (y - blk["mean"]) * jax.lax.rsqrt(blk["var"] + EPS) * blk["gamma"] + blk["beta"]
        y = jnp.maximum(y, 0.0)
        if i > 0 and h.shape[1] == y.shape[1]:
            y = y + h * 0.1
        h = y
    return jnp.squeeze(jnp.dot(h, params["W_out"],
                               preferred_element_type=jnp.float32) + params["b_out"])


if __name__ == "__main__":
    # Lane-aligned hidden widths (multiples of 128), a batch big enough to
    # exercise a 2-step grid (one tile per v7x core), and equal consecutive
    # hidden widths so the residual path is exercised.
    batch, input_size = 256, 32
    hidden_sizes = [128, 128, 128]

    key = jax.random.PRNGKey(0)
    key, kx, kp = jax.random.split(key, 3)
    x = jax.random.normal(kx, (batch, input_size), jnp.float32)
    params = init_params(kp, input_size, hidden_sizes)

    out = traffic_nn_forward(x, params, hidden_sizes)
    out = jax.block_until_ready(out)

    ref = reference_forward(x, params, hidden_sizes)
    assert out.shape == (batch,), out.shape
    # BN folding changes rounding order slightly; tolerance covers that plus
    # MXU f32 matmul lowering differences, while still catching real bugs.
    assert jnp.allclose(out, ref, atol=2e-3, rtol=2e-3), float(jnp.max(jnp.abs(out - ref)))

    print("KERNEL_OK")
</pallas_src>

<mosaic_0001>
module attributes {stable_mosaic.version = 11 : i64} {
  func.func @_fused_mlp_kernel(%arg0: i32, %arg1: memref<128x32xf32, #tpu.memory_space<vmem>>, %arg2: memref<32x128xf32, #tpu.memory_space<vmem>>, %arg3: memref<128x128xf32, #tpu.memory_space<vmem>>, %arg4: memref<128x128xf32, #tpu.memory_space<vmem>>, %arg5: memref<5x128xf32, #tpu.memory_space<vmem>>, %arg6: memref<1x1x128xf32, #tpu.memory_space<vmem>>) attributes {dimension_semantics = [#tpu.dimension_semantics<parallel>], iteration_bounds = array<i64: 2>, scalar_prefetch = 0 : i64, scratch_operands = 0 : i64, tpu.core_type = #tpu.core_type<tc>, window_params = [{transform_indices = @transform_0, window_bounds = array<i64: 128, 32>}, {pipeline_mode = #tpu.pipeline_mode<synchronous>, transform_indices = @transform_1, window_bounds = array<i64: 32, 128>}, {pipeline_mode = #tpu.pipeline_mode<synchronous>, transform_indices = @transform_2, window_bounds = array<i64: 128, 128>}, {pipeline_mode = #tpu.pipeline_mode<synchronous>, transform_indices = @transform_3, window_bounds = array<i64: 128, 128>}, {pipeline_mode = #tpu.pipeline_mode<synchronous>, transform_indices = @transform_4, window_bounds = array<i64: 5, 128>}, {transform_indices = @transform_5, window_bounds = array<i64: 1, 1, 128>}]} {
    %c0 = arith.constant 0 : index
    %c0_0 = arith.constant 0 : index
    %0 = vector.load %arg5[%c0, %c0_0] : memref<5x128xf32, #tpu.memory_space<vmem>>, vector<5x128xf32>
    %c0_1 = arith.constant 0 : index
    %c0_2 = arith.constant 0 : index
    %1 = vector.load %arg1[%c0_1, %c0_2] : memref<128x32xf32, #tpu.memory_space<vmem>>, vector<128x32xf32>
    %c0_3 = arith.constant 0 : index
    %c0_4 = arith.constant 0 : index
    %2 = vector.load %arg2[%c0_3, %c0_4] : memref<32x128xf32, #tpu.memory_space<vmem>>, vector<32x128xf32>
    %cst = arith.constant dense<0.000000e+00> : vector<128x128xf32>
    %3 = tpu.matmul %1, %2, %cst {dimension_numbers = #tpu.dot_dimension_numbers<[1], [0], [0], [1], [0, 0, 1, 1], [], []>} : vector<128x32xf32>, vector<32x128xf32>, vector<128x128xf32> -> vector<128x128xf32>
    %4 = vector.extract_strided_slice %0 {offsets = [0, 0], sizes = [1, 128], strides = [1, 1]} : vector<5x128xf32> to vector<1x128xf32>
    %5 = vector.broadcast %4 : vector<1x128xf32> to vector<128x128xf32>
    %6 = arith.addf %3, %5 : vector<128x128xf32>
    %cst_5 = arith.constant 0.000000e+00 : f32
    %7 = vector.broadcast %cst_5 : f32 to vector<128x128xf32>
    %8 = arith.maximumf %6, %7 : vector<128x128xf32>
    %c0_6 = arith.constant 0 : index
    %c0_7 = arith.constant 0 : index
    %9 = vector.load %arg3[%c0_6, %c0_7] : memref<128x128xf32, #tpu.memory_space<vmem>>, vector<128x128xf32>
    %cst_8 = arith.constant dense<0.000000e+00> : vector<128x128xf32>
    %10 = tpu.matmul %8, %9, %cst_8 {dimension_numbers = #tpu.dot_dimension_numbers<[1], [0], [0], [1], [0, 0, 1, 1], [], []>} : vector<128x128xf32>, vector<128x128xf32>, vector<128x128xf32> -> vector<128x128xf32>
    %11 = vector.extract_strided_slice %0 {offsets = [1, 0], sizes = [1, 128], strides = [1, 1]} : vector<5x128xf32> to vector<1x128xf32>
    %12 = vector.broadcast %11 : vector<1x128xf32> to vector<128x128xf32>
    %13 = arith.addf %10, %12 : vector<128x128xf32>
    %cst_9 = arith.constant 0.000000e+00 : f32
    %14 = vector.broadcast %cst_9 : f32 to vector<128x128xf32>
    %15 = arith.maximumf %13, %14 : vector<128x128xf32>
    %cst_10 = arith.constant 1.000000e-01 : f32
    %16 = vector.broadcast %cst_10 : f32 to vector<128x128xf32>
    %17 = arith.mulf %8, %16 : vector<128x128xf32>
    %18 = arith.addf %15, %17 : vector<128x128xf32>
    %c0_11 = arith.constant 0 : index
    %c0_12 = arith.constant 0 : index
    %19 = vector.load %arg4[%c0_11, %c0_12] : memref<128x128xf32, #tpu.memory_space<vmem>>, vector<128x128xf32>
    %cst_13 = arith.constant dense<0.000000e+00> : vector<128x128xf32>
    %20 = tpu.matmul %18, %19, %cst_13 {dimension_numbers = #tpu.dot_dimension_numbers<[1], [0], [0], [1], [0, 0, 1, 1], [], []>} : vector<128x128xf32>, vector<128x128xf32>, vector<128x128xf32> -> vector<128x128xf32>
    %21 = vector.extract_strided_slice %0 {offsets = [2, 0], sizes = [1, 128], strides = [1, 1]} : vector<5x128xf32> to vector<1x128xf32>
    %22 = vector.broadcast %21 : vector<1x128xf32> to vector<128x128xf32>
    %23 = arith.addf %20, %22 : vector<128x128xf32>
    %cst_14 = arith.constant 0.000000e+00 : f32
    %24 = vector.broadcast %cst_14 : f32 to vector<128x128xf32>
    %25 = arith.maximumf %23, %24 : vector<128x128xf32>
    %cst_15 = arith.constant 1.000000e-01 : f32
    %26 = vector.broadcast %cst_15 : f32 to vector<128x128xf32>
    %27 = arith.mulf %18, %26 : vector<128x128xf32>
    %28 = arith.addf %25, %27 : vector<128x128xf32>
    %29 = vector.extract_strided_slice %0 {offsets = [3, 0], sizes = [1, 128], strides = [1, 1]} : vector<5x128xf32> to vector<1x128xf32>
    %30 = vector.extract_strided_slice %0 {offsets = [4, 0], sizes = [1, 1], strides = [1, 1]} : vector<5x128xf32> to vector<1x1xf32>
    %31 = vector.broadcast %29 : vector<1x128xf32> to vector<128x128xf32>
    %32 = arith.mulf %28, %31 : vector<128x128xf32>
    %cst_16 = arith.constant dense<0.000000e+00> : vector<128xf32>
    %33 = vector.multi_reduction <add>, %32, %cst_16 [1] : vector<128x128xf32> to vector<128xf32>
    %34 = vector.shape_cast %33 : vector<128xf32> to vector<1x1x128xf32>
    %35 = vector.shape_cast %30 : vector<1x1xf32> to vector<1x1x1xf32>
    %36 = vector.broadcast %35 : vector<1x1x1xf32> to vector<1x1x128xf32>
    %37 = arith.addf %34, %36 : vector<1x1x128xf32>
    %c0_17 = arith.constant 0 : index
    %c0_18 = arith.constant 0 : index
    %c0_19 = arith.constant 0 : index
    %38 = vector.load %arg6[%c0_17, %c0_18, %c0_19] : memref<1x1x128xf32, #tpu.memory_space<vmem>>, vector<1x1x128xf32>
    tpu.vector_store %arg6[%c0_17, %c0_18, %c0_19], %37 {strides = array<i32>} : memref<1x1x128xf32, #tpu.memory_space<vmem>>, vector<1x1x128xf32>,
    return
  }
  func.func @transform_0(%arg0: i32) -> (i32, i32) {
    %c0_i32 = arith.constant 0 : i32
    %c0_i32_0 = arith.constant 0 : i32
    return %arg0, %c0_i32 : i32, i32
  }
  func.func @transform_1(%arg0: i32) -> (i32, i32) {
    %c0_i32 = arith.constant 0 : i32
    %c0_i32_0 = arith.constant 0 : i32
    %c0_i32_1 = arith.constant 0 : i32
    return %c0_i32, %c0_i32_0 : i32, i32
  }
  func.func @transform_2(%arg0: i32) -> (i32, i32) {
    %c0_i32 = arith.constant 0 : i32
    %c0_i32_0 = arith.constant 0 : i32
    %c0_i32_1 = arith.constant 0 : i32
    return %c0_i32, %c0_i32_0 : i32, i32
  }
  func.func @transform_3(%arg0: i32) -> (i32, i32) {
    %c0_i32 = arith.constant 0 : i32
    %c0_i32_0 = arith.constant 0 : i32
    %c0_i32_1 = arith.constant 0 : i32
    return %c0_i32, %c0_i32_0 : i32, i32
  }
  func.func @transform_4(%arg0: i32) -> (i32, i32) {
    %c0_i32 = arith.constant 0 : i32
    %c0_i32_0 = arith.constant 0 : i32
    %c0_i32_1 = arith.constant 0 : i32
    return %c0_i32, %c0_i32_0 : i32, i32
  }
  func.func @transform_5(%arg0: i32) -> (i32, i32, i32) {
    %c0_i32 = arith.constant 0 : i32
    %c0_i32_0 = arith.constant 0 : i32
    %c0_i32_1 = arith.constant 0 : i32
    return %arg0, %c0_i32, %c0_i32_0 : i32, i32, i32
  }
}

</mosaic_0001>

<llo_original>
// kernel: tpu_custom_call.1
$region0: #{tpu_custom_call.1}
  #allocation0 [shape = 'u32[]', space=smem, size = 0x4, offset = 0x4, fixed_abs, tag = 'smem constant byte address 0x4 - core index']
  #allocation1 [shape = 'u32[144,128]{1,0:T(1,128)}', space=vmem, size = 0x12000, scoped, tag = 'internal scratch']
  %s0 = inlined_call_operand.vmem [shape: f32[256,32], index: 0, kind: input, shape index: {}]
  %s1 = inlined_call_operand.vmem [shape: f32[32,128], index: 1, kind: input, shape index: {}]
  %s2 = inlined_call_operand.vmem [shape: f32[128,128], index: 2, kind: input, shape index: {}]
  %s3 = inlined_call_operand.vmem [shape: f32[128,128], index: 3, kind: input, shape index: {}]
  %s4 = inlined_call_operand.vmem [shape: f32[5,128], index: 4, kind: input, shape index: {}]
  %s5 = inlined_call_operand.hbm [shape: f32[2,1,128], index: 5, kind: output, shape index: {}]
  %s6 = sld [smem:[#allocation0]]
  $region53: #{tpu_custom_call.1} parent=0
    _
  %s8 = ssub.s32 1, %s6
  %s9 = scalar_select 0, %s8, %s6
  $region1: #{tpu_custom_call.1} parent=0
    #allocation2 [shape = 'u8[1024]{0}', space=vmem, size = 0x400, scoped, tag = 'output window, operand 0']
    #allocation3 [shape = 's32[2]{0}', space=sflag, size = 0x8, scoped, tag = 'scoped memory for tpu_custom_call.1']
    %10 = vsyncpa [#allocation3], 0
    %s11 = scalar_lea.sflag [#allocation3], 1
    %12 = vsyncpa %s11, 0
    loop: start=0, step=1, limit=4
    $region2: #{tpu_custom_call.1} parent=1 // loop_pre_header
      _
    $region3: #{tpu_custom_call.1} parent=1 // loop_header
      %s14 = sphi 0, %s18
      %p15 = scmp.ge.s32.totalorder %s14, 4
      %s24 = sphi 0, %s26
      %s27 = sphi 0, %s24
      %s28 = sphi 0, %s27
      %s44 = sphi 0, %s28
      %s48 = sphi 0, %s48
      %s50 = sphi 0, %s48
      %s51 = sphi 0, %s50
      %s65 = sphi 0, %s51
      %s69 = sphi 0, %s69
      %s71 = sphi 0, %s69
      %s72 = sphi 0, %s71
      %s86 = sphi 0, %s72
      %s90 = sphi 0, %s90
      %s92 = sphi 0, %s90
      %s93 = sphi 0, %s92
      %s107 = sphi 0, %s93
      %s111 = sphi 0, %s111
      %s113 = sphi 0, %s111
      %s114 = sphi 0, %s113
      %s128 = sphi 0, %s114
      %s134 = sphi 0, %s136
      %s137 = sphi 0, %s134
      %s138 = sphi 0, %s137
      %s154 = sphi 0, %s138
    $region4: #{tpu_custom_call.1} parent=1 // loop_header_branch
      %17 = sbr.rel (%p15) target = $region8
    $region5: #{tpu_custom_call.1} parent=1 // loop_body
      %s19 = ssub.s32 %s14, 1
      %s20 = ssub.s32 %s14, 2
      %s21 = sadd.s32 %s14, 1
      %s22 = ssub.s32 %s14, %s21
      %p23 = scmp.eq.s32.totalorder %s22, 0
      %s25 = sadd.s32 %s24, 1
      %s26 = scalar_select %p23, %s24, %s25
      %p29 = pneg %p23
      %p30 = scmp.eq.s32.totalorder %s14, 1
      %p31 = por %p29, %p30
      %p32 = scmp.ne.s32.totalorder %s24, %s27
      %p33 = scmp.eq.s32.totalorder %s14, 0
      %p34 = por %p32, %p33
      %p35 = scmp.ne.s32.totalorder %s24, %s27
      %p36 = scmp.eq.s32.totalorder %s19, 1
      %p37 = por %p35, %p36
      %p38 = scmp.ne.s32.totalorder %s27, %s28
      %p39 = scmp.eq.s32.totalorder %s19, 0
      %p40 = por %p38, %p39
      %p41 = scmp.ne.s32.totalorder %s27, %s28
      %p42 = scmp.eq.s32.totalorder %s20, 1
      %p43 = por %p41, %p42
      %p45 = scmp.ne.s32.totalorder %s28, %s44
      %p46 = scmp.eq.s32.totalorder %s20, 0
      %p47 = por %p45, %p46
      %s49 = sadd.s32 %s48, 1
      %p52 = scmp.eq.s32.totalorder %s14, 1
      %p53 = scmp.ne.s32.totalorder %s48, %s50
      %p54 = scmp.eq.s32.totalorder %s14, 0
      %p55 = por %p53, %p54
      %p56 = scmp.ne.s32.totalorder %s48, %s50
      %p57 = scmp.eq.s32.totalorder %s19, 1
      %p58 = por %p56, %p57
      %p59 = scmp.ne.s32.totalorder %s50, %s51
      %p60 = scmp.eq.s32.totalorder %s19, 0
      %p61 = por %p59, %p60
      %p62 = scmp.ne.s32.totalorder %s50, %s51
      %p63 = scmp.eq.s32.totalorder %s20, 1
      %p64 = por %p62, %p63
      %p66 = scmp.ne.s32.totalorder %s51, %s65
      %p67 = scmp.eq.s32.totalorder %s20, 0
      %p68 = por %p66, %p67
      %s70 = sadd.s32 %s69, 1
      %p73 = scmp.eq.s32.totalorder %s14, 1
      %p74 = scmp.ne.s32.totalorder %s69, %s71
      %p75 = scmp.eq.s32.totalorder %s14, 0
      %p76 = por %p74, %p75
      %p77 = scmp.ne.s32.totalorder %s69, %s71
      %p78 = scmp.eq.s32.totalorder %s19, 1
      %p79 = por %p77, %p78
      %p80 = scmp.ne.s32.totalorder %s71, %s72
      %p81 = scmp.eq.s32.totalorder %s19, 0
      %p82 = por %p80, %p81
      %p83 = scmp.ne.s32.totalorder %s71, %s72
      %p84 = scmp.eq.s32.totalorder %s20, 1
      %p85 = por %p83, %p84
      %p87 = scmp.ne.s32.totalorder %s72, %s86
      %p88 = scmp.eq.s32.totalorder %s20, 0
      %p89 = por %p87, %p88
      %s91 = sadd.s32 %s90, 1
      %p94 = scmp.eq.s32.totalorder %s14, 1
      %p95 = scmp.ne.s32.totalorder %s90, %s92
      %p96 = scmp.eq.s32.totalorder %s14, 0
      %p97 = por %p95, %p96
      %p98 = scmp.ne.s32.totalorder %s90, %s92
      %p99 = scmp.eq.s32.totalorder %s19, 1
      %p100 = por %p98, %p99
      %p101 = scmp.ne.s32.totalorder %s92, %s93
      %p102 = scmp.eq.s32.totalorder %s19, 0
      %p103 = por %p101, %p102
      %p104 = scmp.ne.s32.totalorder %s92, %s93
      %p105 = scmp.eq.s32.totalorder %s20, 1
      %p106 = por %p104, %p105
      %p108 = scmp.ne.s32.totalorder %s93, %s107
      %p109 = scmp.eq.s32.totalorder %s20, 0
      %p110 = por %p108, %p109
      %s112 = sadd.s32 %s111, 1
      %p115 = scmp.eq.s32.totalorder %s14, 1
      %p116 = scmp.ne.s32.totalorder %s111, %s113
      %p117 = scmp.eq.s32.totalorder %s14, 0
      %p118 = por %p116, %p117
      %p119 = scmp.ne.s32.totalorder %s111, %s113
      %p120 = scmp.eq.s32.totalorder %s19, 1
      %p121 = por %p119, %p120
      %p122 = scmp.ne.s32.totalorder %s113, %s114
      %p123 = scmp.eq.s32.totalorder %s19, 0
      %p124 = por %p122, %p123
      %p125 = scmp.ne.s32.totalorder %s113, %s114
      %p126 = scmp.eq.s32.totalorder %s20, 1
      %p127 = por %p125, %p126
      %p129 = scmp.ne.s32.totalorder %s114, %s128
      %p130 = scmp.eq.s32.totalorder %s20, 0
      %p131 = por %p129, %p130
      %s132 = ssub.s32 %s14, %s21
      %p133 = scmp.eq.s32.totalorder %s132, 0
      %s135 = sadd.s32 %s134, 1
      %s136 = scalar_select %p133, %s134, %s135
      %p139 = pneg %p133
      %p140 = scmp.eq.s32.totalorder %s14, 1
      %p141 = por %p139, %p140
      %p142 = scmp.ne.s32.totalorder %s134, %s137
      %p143 = scmp.eq.s32.totalorder %s14, 0
      %p144 = por %p142, %p143
      %p145 = scmp.ne.s32.totalorder %s134, %s137
      %p146 = scmp.eq.s32.totalorder %s19, 1
      %p147 = por %p145, %p146
      %p148 = scmp.ne.s32.totalorder %s137, %s138
      %p149 = scmp.eq.s32.totalorder %s19, 0
      %p150 = por %p148, %p149
      %p151 = scmp.ne.s32.totalorder %s137, %s138
      %p152 = scmp.eq.s32.totalorder %s20, 1
      %p153 = por %p151, %p152
      %p155 = scmp.ne.s32.totalorder %s138, %s154
      %p156 = scmp.eq.s32.totalorder %s20, 0
      %p157 = por %p155, %p156
      %p158 = scmp.le.s32.totalorder 1, %s14
      %p159 = scmp.lt.s32.totalorder %s14, 3
      %p160 = pnand %p158, %p159
      %p161 = pneg %p160
      // Predicated region
      $region9: #{tpu_custom_call.1} parent=5 // pred_check
        _
      $region10: #{tpu_custom_call.1} parent=5 // pred_check_branch
        %163 = sbr.rel (%p160) target = $region12
      $region11: #{tpu_custom_call.1} parent=5 // pred_region
        %s164 = ssub.s32 %s14, 1
        // Predicated region
        $region13: #{tpu_custom_call.1} parent=11 // pred_check
          %p165 = pneg %p61
        $region14: #{tpu_custom_call.1} parent=11 // pred_check_branch
          %167 = sbr.rel (%p165) target = $region16
        $region15: #{tpu_custom_call.1} parent=11 // pred_region
          _
        $region16: #{tpu_custom_call.1} parent=11 // pred_fallthru
          _
        // Predicated region
        $region17: #{tpu_custom_call.1} parent=11 // pred_check
          %p168 = pneg %p82
        $region18: #{tpu_custom_call.1} parent=11 // pred_check_branch
          %170 = sbr.rel (%p168) target = $region20
        $region19: #{tpu_custom_call.1} parent=11 // pred_region
          _
        $region20: #{tpu_custom_call.1} parent=11 // pred_fallthru
          _
        // Predicated region
        $region21: #{tpu_custom_call.1} parent=11 // pred_check
          %p171 = pneg %p103
        $region22: #{tpu_custom_call.1} parent=11 // pred_check_branch
          %173 = sbr.rel (%p171) target = $region24
        $region23: #{tpu_custom_call.1} parent=11 // pred_region
          _
        $region24: #{tpu_custom_call.1} parent=11 // pred_fallthru
          _
        // Predicated region
        $region25: #{tpu_custom_call.1} parent=11 // pred_check
          %p174 = pneg %p124
        $region26: #{tpu_custom_call.1} parent=11 // pred_check_branch
          %176 = sbr.rel (%p174) target = $region28
        $region27: #{tpu_custom_call.1} parent=11 // pred_region
          _
        $region28: #{tpu_custom_call.1} parent=11 // pred_fallthru
          _
      $region12: #{tpu_custom_call.1} parent=5 // pred_fallthru
        _
      %p177 = scmp.lt.s32.totalorder %s14, 2
      // Predicated region
      $region29: #{tpu_custom_call.1} parent=5 // pred_check
        %p178 = pneg %p177
      $region30: #{tpu_custom_call.1} parent=5 // pred_check_branch
        %180 = sbr.rel (%p178) target = $region32
      $region31: #{tpu_custom_call.1} parent=5 // pred_region
        // Predicated region
        $region33: #{tpu_custom_call.1} parent=31 // pred_check
          %p181 = pneg %p34
        $region34: #{tpu_custom_call.1} parent=31 // pred_check_branch
          %183 = sbr.rel (%p181) target = $region36
        $region35: #{tpu_custom_call.1} parent=31 // pred_region
          %s184 = smul.u32 16, %s14
          %p185 = scmp.lt.s32.totalorder %s184, 31
          %s186 = scalar_select %p185, %s184, 31
          %s187 = smul.addr %s186, 8
          %s188 = scalar_lea.vmem %s0, %s187
          %s189 = smul.u32 16, %s14
        $region36: #{tpu_custom_call.1} parent=31 // pred_fallthru
          _
      $region32: #{tpu_custom_call.1} parent=5 // pred_fallthru
        _
      %p190 = scmp.le.s32.totalorder 1, %s14
      %p191 = scmp.lt.s32.totalorder %s14, 3
      %p192 = pnand %p190, %p191
      %p193 = pneg %p192
      // Predicated region
      $region37: #{tpu_custom_call.1} parent=5 // pred_check
        _
      $region38: #{tpu_custom_call.1} parent=5 // pred_check_branch
        %195 = sbr.rel (%p192) target = $region40
      $region39: #{tpu_custom_call.1} parent=5 // pred_region
        %s196 = ssub.s32 %s14, 1
        %s197 = smul.u32 16, %s19
        %p198 = scmp.lt.s32.totalorder %s197, 31
        %s199 = scalar_select %p198, %s197, 31
        %s200 = smul.addr %s199, 8
        %s201 = scalar_lea.vmem %s0, %s200
        %p202 = pneg %p40
        %p203 = pneg %p37
        %p204 = pneg %p61
        %p205 = pneg %p58
        %p206 = pneg %p82
        %p207 = pneg %p79
        %p208 = pneg %p103
        %p209 = pneg %p100
        %p210 = pneg %p124
        %p211 = pneg %p121
        %p212 = pneg %p150
        %p213 = pneg %p147
        %s214 = sand.u32 %s137, 1
        %s215 = scalar_lea.sflag [#allocation3], %s214
        %s216 = sand.u32 %s137, 1
        %s217 = scalar_lea.vmem [#allocation2], %s216
        %s218 = smul.u32 16, %s19
        %p219 = scmp.lt.s32.totalorder %s218, 31
        %s220 = scalar_select %p219, %s218, 31
        %s221 = smul.addr %s220, 8
        %s222 = scalar_lea.vmem %s0, %s221
        %s223 = smul.u32 16, %s19
        %v224 = vld [vmem:[%s4] sm:$0x1f]
        %v225 = vld [vmem:[%s222] sm:$0xff]
        %v226 = vld [vmem:[%s222 + $0x8] sm:$0xff]
        %v227 = vld [vmem:[%s222 + $0x10] sm:$0xff]
        %v228 = vld [vmem:[%s222 + $0x18] sm:$0xff]
        %v229 = vld [vmem:[%s222 + $0x20] sm:$0xff]
        %v230 = vld [vmem:[%s222 + $0x28] sm:$0xff]
        %v231 = vld [vmem:[%s222 + $0x30] sm:$0xff]
        %v232 = vld [vmem:[%s222 + $0x38] sm:$0xff]
        %v233 = vld [vmem:[%s222 + $0x40] sm:$0xff]
        %v234 = vld [vmem:[%s222 + $0x48] sm:$0xff]
        %v235 = vld [vmem:[%s222 + $0x50] sm:$0xff]
        %v236 = vld [vmem:[%s222 + $0x58] sm:$0xff]
        %v237 = vld [vmem:[%s222 + $0x60] sm:$0xff]
        %v238 = vld [vmem:[%s222 + $0x68] sm:$0xff]
        %v239 = vld [vmem:[%s222 + $0x70] sm:$0xff]
        %v240 = vld [vmem:[%s222 + $0x78] sm:$0xff]
        %v241 = vld [vmem:[%s1] sm:$0xff]
        %v242 = vld [vmem:[%s1 + $0x8] sm:$0xff]
        %v243 = vld [vmem:[%s1 + $0x10] sm:$0xff]
        %v244 = vld [vmem:[%s1 + $0x18] sm:$0xff]
        %v245 = vlaneseq
        %v246 = vshrl.u32 %v245, 7
        %v247 = vsub.s32 0, %v246
        %v248 = vrot.slane %v224, %v247
        %vm249 = vcmask 261120
        %v251 = vsel %vm249, %v225, 0
        %v254 = vsel %vm249, %v226, 0
        %v257 = vsel %vm249, %v227, 0
        %v260 = vsel %vm249, %v228, 0
        %v263 = vsel %vm249, %v229, 0
        %v266 = vsel %vm249, %v230, 0
        %v269 = vsel %vm249, %v231, 0
        %v272 = vsel %vm249, %v232, 0
        %v275 = vsel %vm249, %v233, 0
        %v278 = vsel %vm249, %v234, 0
        %v281 = vsel %vm249, %v235, 0
        %v284 = vsel %vm249, %v236, 0
        %v287 = vsel %vm249, %v237, 0
        %v290 = vsel %vm249, %v238, 0
        %v293 = vsel %vm249, %v239, 0
        %v296 = vsel %vm249, %v240, 0
        %298 = vmatprep.subr.mxu0 0.0
        %299 = vmatpush1.msra.mxu0 %v241
        %300 = vmatprep.subr.mxu0 0.0
        %301 = vmatpush1.msra.mxu0 %v242
        %302 = vmatprep.subr.mxu0 0.0
        %303 = vmatpush1.msra.mxu0 %v243
        %304 = vmatprep.subr.mxu0 0.0
        %305 = vmatpush1.msra.mxu0 %v244
        %306 = vmatprep.subr.mxu0 0.0
        %307 = vmatpush1.msra.mxu0 0.0
        %308 = vmatprep.subr.mxu0 0.0
        %309 = vmatpush1.msra.mxu0 0.0
        %310 = vmatprep.subr.mxu0 0.0
        %311 = vmatpush1.msra.mxu0 0.0
        %312 = vmatprep.subr.mxu0 0.0
        %313 = vmatpush1.msra.mxu0 0.0
        %314 = vmatprep.subr.mxu0 0.0
        %315 = vmatpush1.msra.mxu0 0.0
        %316 = vmatprep.subr.mxu0 0.0
        %317 = vmatpush1.msra.mxu0 0.0
        %318 = vmatprep.subr.mxu0 0.0
        %319 = vmatpush1.msra.mxu0 0.0
        %320 = vmatprep.subr.mxu0 0.0
        %321 = vmatpush1.msra.mxu0 0.0
        %322 = vmatprep.subr.mxu0 0.0
        %323 = vmatpush1.msra.mxu0 0.0
        %324 = vmatprep.subr.mxu0 0.0
        %325 = vmatpush1.msra.mxu0 0.0
        %326 = vmatprep.subr.mxu0 0.0
        %327 = vmatpush1.msra.mxu0 0.0
        %328 = vmatprep.subr.mxu0 0.0
        %329 = vmatpush1.msra.mxu0 0.0
        %330 = vmatprep.subr.mxu0 0.0
        %331 = vmatpush1.msra.mxu0 0.0
        %332 = vmatprep.subr.mxu0 0.0
        %333 = vmatpush1.msra.mxu0 0.0
        %334 = vmatprep.subr.mxu0 0.0
        %335 = vmatpush1.msra.mxu0 0.0
        %336 = vmatprep.subr.mxu0 0.0
        %337 = vmatpush1.msra.mxu0 0.0
        %338 = vmatprep.subr.mxu0 0.0
        %339 = vmatpush1.msra.mxu0 0.0
        %340 = vmatprep.subr.mxu0 0.0
        %341 = vmatpush1.msra.mxu0 0.0
        %342 = vmatprep.subr.mxu0 0.0
        %343 = vmatpush1.msra.mxu0 0.0
        %344 = vmatprep.subr.mxu0 0.0
        %345 = vmatpush1.msra.mxu0 0.0
        %346 = vmatprep.subr.mxu0 0.0
        %347 = vmatpush1.msra.mxu0 0.0
        %348 = vmatprep.subr.mxu0 0.0
        %349 = vmatpush1.msra.mxu0 0.0
        %350 = vmatprep.subr.mxu0 0.0
        %351 = vmatpush1.msra.mxu0 0.0
        %352 = vmatprep.subr.mxu0 0.0
        %353 = vmatpush1.msra.mxu0 0.0
        %354 = vmatprep.subr.mxu0 0.0
        %355 = vmatpush1.msra.mxu0 0.0
        %356 = vmatprep.subr.mxu0 0.0
        %357 = vmatpush1.msra.mxu0 0.0
        %358 = vmatprep.subr.mxu0 0.0
        %359 = vmatpush1.msra.mxu0 0.0
        %360 = vmatprep.subr.mxu0 0.0
        %361 = vmatpush1.msra.mxu0 0.0
        %362 = vmatprep.mubr.f32.mxu0 0.0
        %363 = vmatmul.mubr.f32.gmra.mrb[0].mxu0 %v251
        %v364 = vpop.f32.mrb[0].mxu0
        %v365 = vadd.f32 %v248, %v364
        %v366 = vpop.f32.mrb[0].mxu0
        %367 = vmatprep.mubr.f32.mxu0 0.0
        %368 = vmatmul.mubr.f32.gmra.mrb[0].mxu0 %v254
        %v369 = vpop.f32.mrb[0].mxu0
        %v370 = vadd.f32 %v248, %v369
        %v371 = vpop.f32.mrb[0].mxu0
        %372 = vmatprep.mubr.f32.mxu0 0.0
        %373 = vmatmul.mubr.f32.gmra.mrb[0].mxu0 %v257
        %v374 = vpop.f32.mrb[0].mxu0
        %v375 = vadd.f32 %v248, %v374
        %v376 = vpop.f32.mrb[0].mxu0
        %377 = vmatprep.mubr.f32.mxu0 0.0
        %378 = vmatmul.mubr.f32.gmra.mrb[0].mxu0 %v260
        %v379 = vpop.f32.mrb[0].mxu0
        %v380 = vadd.f32 %v248, %v379
        %v381 = vpop.f32.mrb[0].mxu0
        %382 = vmatprep.mubr.f32.mxu0 0.0
        %383 = vmatmul.mubr.f32.gmra.mrb[0].mxu0 %v263
        %v384 = vpop.f32.mrb[0].mxu0
        %v385 = vadd.f32 %v248, %v384
        %v386 = vpop.f32.mrb[0].mxu0
        %387 = vmatprep.mubr.f32.mxu0 0.0
        %388 = vmatmul.mubr.f32.gmra.mrb[0].mxu0 %v266
        %v389 = vpop.f32.mrb[0].mxu0
        %v390 = vadd.f32 %v248, %v389
        %v391 = vpop.f32.mrb[0].mxu0
        %392 = vmatprep.mubr.f32.mxu0 0.0
        %393 = vmatmul.mubr.f32.gmra.mrb[0].mxu0 %v269
        %v394 = vpop.f32.mrb[0].mxu0
        %v395 = vadd.f32 %v248, %v394
        %v396 = vpop.f32.mrb[0].mxu0
        %397 = vmatprep.mubr.f32.mxu0 0.0
        %398 = vmatmul.mubr.f32.gmra.mrb[0].mxu0 %v272
        %v399 = vpop.f32.mrb[0].mxu0
        %v400 = vadd.f32 %v248, %v399
        %v401 = vpop.f32.mrb[0].mxu0
        %402 = vmatprep.mubr.f32.mxu0 0.0
        %403 = vmatmul.mubr.f32.gmra.mrb[0].mxu0 %v275
        %v404 = vpop.f32.mrb[0].mxu0
        %v405 = vadd.f32 %v248, %v404
        %v406 = vpop.f32.mrb[0].mxu0
        %407 = vmatprep.mubr.f32.mxu0 0.0
        %408 = vmatmul.mubr.f32.gmra.mrb[0].mxu0 %v278
        %v409 = vpop.f32.mrb[0].mxu0
        %v410 = vadd.f32 %v248, %v409
        %v411 = vpop.f32.mrb[0].mxu0
        %412 = vmatprep.mubr.f32.mxu0 0.0
        %413 = vmatmul.mubr.f32.gmra.mrb[0].mxu0 %v281
        %v414 = vpop.f32.mrb[0].mxu0
        %v415 = vadd.f32 %v248, %v414
        %v416 = vpop.f32.mrb[0].mxu0
        %417 = vmatprep.mubr.f32.mxu0 0.0
        %418 = vmatmul.mubr.f32.gmra.mrb[0].mxu0 %v284
        %v419 = vpop.f32.mrb[0].mxu0
        %v420 = vadd.f32 %v248, %v419
        %v421 = vpop.f32.mrb[0].mxu0
        %422 = vmatprep.mubr.f32.mxu0 0.0
        %423 = vmatmul.mubr.f32.gmra.mrb[0].mxu0 %v287
        %v424 = vpop.f32.mrb[0].mxu0
        %v425 = vadd.f32 %v248, %v424
        %v426 = vpop.f32.mrb[0].mxu0
        %427 = vmatprep.mubr.f32.mxu0 0.0
        %428 = vmatmul.mubr.f32.gmra.mrb[0].mxu0 %v290
        %v429 = vpop.f32.mrb[0].mxu0
        %v430 = vadd.f32 %v248, %v429
        %v431 = vpop.f32.mrb[0].mxu0
        %432 = vmatprep.mubr.f32.mxu0 0.0
        %433 = vmatmul.mubr.f32.gmra.mrb[0].mxu0 %v293
        %v434 = vpop.f32.mrb[0].mxu0
        %v435 = vadd.f32 %v248, %v434
        %v436 = vpop.f32.mrb[0].mxu0
        %437 = vmatprep.mubr.f32.mxu0 0.0
        %438 = vmatmul.mubr.f32.gmra.mrb[0].mxu0 %v296
        %v439 = vpop.f32.mrb[0].mxu0
        %v440 = vadd.f32 %v248, %v439
        %v441 = vpop.f32.mrb[0].mxu0
        %442 = vdwg.mxu0
        %v443 = vmax.f32 %v365, 0.0
        %v444 = vmax.f32 %v370, 0.0
        %v445 = vmax.f32 %v375, 0.0
        %v446 = vmax.f32 %v380, 0.0
        %v447 = vmax.f32 %v385, 0.0
        %v448 = vmax.f32 %v390, 0.0
        %v449 = vmax.f32 %v395, 0.0
        %v450 = vmax.f32 %v400, 0.0
        %v451 = vmax.f32 %v405, 0.0
        %v452 = vmax.f32 %v410, 0.0
        %v453 = vmax.f32 %v415, 0.0
        %v454 = vmax.f32 %v420, 0.0
        %v455 = vmax.f32 %v425, 0.0
        %v456 = vmax.f32 %v430, 0.0
        %v457 = vmax.f32 %v435, 0.0
        %v458 = vmax.f32 %v440, 0.0
        %v459 = vld [vmem:[%s2] sm:$0xff]
        %v460 = vld [vmem:[%s2 + $0x8] sm:$0xff]
        %v461 = vld [vmem:[%s2 + $0x10] sm:$0xff]
        %v462 = vld [vmem:[%s2 + $0x18] sm:$0xff]
        %v463 = vld [vmem:[%s2 + $0x20] sm:$0xff]
        %v464 = vld [vmem:[%s2 + $0x28] sm:$0xff]
        %v465 = vld [vmem:[%s2 + $0x30] sm:$0xff]
        %v466 = vld [vmem:[%s2 + $0x38] sm:$0xff]
        %v467 = vld [vmem:[%s2 + $0x40] sm:$0xff]
        %v468 = vld [vmem:[%s2 + $0x48] sm:$0xff]
        %v469 = vld [vmem:[%s2 + $0x50] sm:$0xff]
        %v470 = vld [vmem:[%s2 + $0x58] sm:$0xff]
        %v471 = vld [vmem:[%s2 + $0x60] sm:$0xff]
        %v472 = vld [vmem:[%s2 + $0x68] sm:$0xff]
        %v473 = vld [vmem:[%s2 + $0x70] sm:$0xff]
        %v474 = vld [vmem:[%s2 + $0x78] sm:$0xff]
        %v475 = vlaneseq
        %v476 = vshrl.u32 %v475, 7
        %v477 = vsub.s32 1, %v476
        %v478 = vrot.slane %v224, %v477
        %479 = vmatprep.subr.mxu0 0.0
        %480 = vmatpush1.msra.mxu0 %v459
        %481 = vmatprep.subr.mxu0 0.0
        %482 = vmatpush1.msra.mxu0 %v460
        %483 = vmatprep.subr.mxu0 0.0
        %484 = vmatpush1.msra.mxu0 %v461
        %485 = vmatprep.subr.mxu0 0.0
        %486 = vmatpush1.msra.mxu0 %v462
        %487 = vmatprep.subr.mxu0 0.0
        %488 = vmatpush1.msra.mxu0 %v463
        %489 = vmatprep.subr.mxu0 0.0
        %490 = vmatpush1.msra.mxu0 %v464
        %491 = vmatprep.subr.mxu0 0.0
        %492 = vmatpush1.msra.mxu0 %v465
        %493 = vmatprep.subr.mxu0 0.0
        %494 = vmatpush1.msra.mxu0 %v466
        %495 = vmatprep.subr.mxu0 0.0
        %496 = vmatpush1.msra.mxu0 %v467
        %497 = vmatprep.subr.mxu0 0.0
        %498 = vmatpush1.msra.mxu0 %v468
        %499 = vmatprep.subr.mxu0 0.0
        %500 = vmatpush1.msra.mxu0 %v469
        %501 = vmatprep.subr.mxu0 0.0
        %502 = vmatpush1.msra.mxu0 %v470
        %503 = vmatprep.subr.mxu0 0.0
        %504 = vmatpush1.msra.mxu0 %v471
        %505 = vmatprep.subr.mxu0 0.0
        %506 = vmatpush1.msra.mxu0 %v472
        %507 = vmatprep.subr.mxu0 0.0
        %508 = vmatpush1.msra.mxu0 %v473
        %509 = vmatprep.subr.mxu0 0.0
        %510 = vmatpush1.msra.mxu0 %v474
        %511 = vmatprep.subr.mxu0 0.0
        %512 = vmatpush1.msra.mxu0 0.0
        %513 = vmatprep.subr.mxu0 0.0
        %514 = vmatpush1.msra.mxu0 0.0
        %515 = vmatprep.subr.mxu0 0.0
        %516 = vmatpush1.msra.mxu0 0.0
        %517 = vmatprep.subr.mxu0 0.0
        %518 = vmatpush1.msra.mxu0 0.0
        %519 = vmatprep.subr.mxu0 0.0
        %520 = vmatpush1.msra.mxu0 0.0
        %521 = vmatprep.subr.mxu0 0.0
        %522 = vmatpush1.msra.mxu0 0.0
        %523 = vmatprep.subr.mxu0 0.0
        %524 = vmatpush1.msra.mxu0 0.0
        %525 = vmatprep.subr.mxu0 0.0
        %526 = vmatpush1.msra.mxu0 0.0
        %527 = vmatprep.subr.mxu0 0.0
        %528 = vmatpush1.msra.mxu0 0.0
        %529 = vmatprep.subr.mxu0 0.0
        %530 = vmatpush1.msra.mxu0 0.0
        %531 = vmatprep.subr.mxu0 0.0
        %532 = vmatpush1.msra.mxu0 0.0
        %533 = vmatprep.subr.mxu0 0.0
        %534 = vmatpush1.msra.mxu0 0.0
        %535 = vmatprep.subr.mxu0 0.0
        %536 = vmatpush1.msra.mxu0 0.0
        %537 = vmatprep.subr.mxu0 0.0
        %538 = vmatpush1.msra.mxu0 0.0
        %539 = vmatprep.subr.mxu0 0.0
        %540 = vmatpush1.msra.mxu0 0.0
        %541 = vmatprep.subr.mxu0 0.0
        %542 = vmatpush1.msra.mxu0 0.0
        %543 = vmatprep.mubr.f32.mxu0 0.0
        %544 = vmatmul.mubr.f32.gmra.mrb[0].mxu0 %v443
        %v545 = vpop.f32.mrb[0].mxu0
        %v546 = vadd.f32 %v478, %v545
        %v547 = vpop.f32.mrb[0].mxu0
        %548 = vmatprep.mubr.f32.mxu0 0.0
        %549 = vmatmul.mubr.f32.gmra.mrb[0].mxu0 %v444
        %v550 = vpop.f32.mrb[0].mxu0
        %v551 = vadd.f32 %v478, %v550
        %v552 = vpop.f32.mrb[0].mxu0
        %553 = vmatprep.mubr.f32.mxu0 0.0
        %554 = vmatmul.mubr.f32.gmra.mrb[0].mxu0 %v445
        %v555 = vpop.f32.mrb[0].mxu0
        %v556 = vadd.f32 %v478, %v555
        %v557 = vpop.f32.mrb[0].mxu0
        %558 = vmatprep.mubr.f32.mxu0 0.0
        %559 = vmatmul.mubr.f32.gmra.mrb[0].mxu0 %v446
        %v560 = vpop.f32.mrb[0].mxu0
        %v561 = vadd.f32 %v478, %v560
        %v562 = vpop.f32.mrb[0].mxu0
        %563 = vmatprep.mubr.f32.mxu0 0.0
        %564 = vmatmul.mubr.f32.gmra.mrb[0].mxu0 %v447
        %v565 = vpop.f32.mrb[0].mxu0
        %v566 = vadd.f32 %v478, %v565
        %v567 = vpop.f32.mrb[0].mxu0
        %568 = vmatprep.mubr.f32.mxu0 0.0
        %569 = vmatmul.mubr.f32.gmra.mrb[0].mxu0 %v448
        %v570 = vpop.f32.mrb[0].mxu0
        %v571 = vadd.f32 %v478, %v570
        %v572 = vpop.f32.mrb[0].mxu0
        %573 = vmatprep.mubr.f32.mxu0 0.0
        %574 = vmatmul.mubr.f32.gmra.mrb[0].mxu0 %v449
        %v575 = vpop.f32.mrb[0].mxu0
        %v576 = vadd.f32 %v478, %v575
        %v577 = vpop.f32.mrb[0].mxu0
        %578 = vmatprep.mubr.f32.mxu0 0.0
        %579 = vmatmul.mubr.f32.gmra.mrb[0].mxu0 %v450
        %v580 = vpop.f32.mrb[0].mxu0
        %v581 = vadd.f32 %v478, %v580
        %v582 = vpop.f32.mrb[0].mxu0
        %583 = vmatprep.mubr.f32.mxu0 0.0
        %584 = vmatmul.mubr.f32.gmra.mrb[0].mxu0 %v451
        %v585 = vpop.f32.mrb[0].mxu0
        %v586 = vadd.f32 %v478, %v585
        %v587 = vpop.f32.mrb[0].mxu0
        %588 = vmatprep.mubr.f32.mxu0 0.0
        %589 = vmatmul.mubr.f32.gmra.mrb[0].mxu0 %v452
        %v590 = vpop.f32.mrb[0].mxu0
        %v591 = vadd.f32 %v478, %v590
        %v592 = vpop.f32.mrb[0].mxu0
        %593 = vmatprep.mubr.f32.mxu0 0.0
        %594 = vmatmul.mubr.f32.gmra.mrb[0].mxu0 %v453
        %v595 = vpop.f32.mrb[0].mxu0
        %v596 = vadd.f32 %v478, %v595
        %v597 = vpop.f32.mrb[0].mxu0
        %598 = vmatprep.mubr.f32.mxu0 0.0
        %599 = vmatmul.mubr.f32.gmra.mrb[0].mxu0 %v454
        %v600 = vpop.f32.mrb[0].mxu0
        %v601 = vadd.f32 %v478, %v600
        %v602 = vpop.f32.mrb[0].mxu0
        %603 = vmatprep.mubr.f32.mxu0 0.0
        %604 = vmatmul.mubr.f32.gmra.mrb[0].mxu0 %v455
        %v605 = vpop.f32.mrb[0].mxu0
        %v606 = vadd.f32 %v478, %v605
        %v607 = vpop.f32.mrb[0].mxu0
        %608 = vmatprep.mubr.f32.mxu0 0.0
        %609 = vmatmul.mubr.f32.gmra.mrb[0].mxu0 %v456
        %v610 = vpop.f32.mrb[0].mxu0
        %v611 = vadd.f32 %v478, %v610
        %v612 = vpop.f32.mrb[0].mxu0
        %613 = vmatprep.mubr.f32.mxu0 0.0
        %614 = vmatmul.mubr.f32.gmra.mrb[0].mxu0 %v457
        %v615 = vpop.f32.mrb[0].mxu0
        %v616 = vadd.f32 %v478, %v615
        %v617 = vpop.f32.mrb[0].mxu0
        %618 = vmatprep.mubr.f32.mxu0 0.0
        %619 = vmatmul.mubr.f32.gmra.mrb[0].mxu0 %v458
        %v620 = vpop.f32.mrb[0].mxu0
        %v621 = vadd.f32 %v478, %v620
        %v622 = vpop.f32.mrb[0].mxu0
        %623 = vdwg.mxu0
        %v624 = vmax.f32 %v546, 0.0
        %v625 = vmax.f32 %v551, 0.0
        %v626 = vmax.f32 %v556, 0.0
        %v627 = vmax.f32 %v561, 0.0
        %v628 = vmax.f32 %v566, 0.0
        %v629 = vmax.f32 %v571, 0.0
        %v630 = vmax.f32 %v576, 0.0
        %v631 = vmax.f32 %v581, 0.0
        %v632 = vmax.f32 %v586, 0.0
        %v633 = vmax.f32 %v591, 0.0
        %v634 = vmax.f32 %v596, 0.0
        %v635 = vmax.f32 %v601, 0.0
        %v636 = vmax.f32 %v606, 0.0
        %v637 = vmax.f32 %v611, 0.0
        %v638 = vmax.f32 %v616, 0.0
        %v639 = vmax.f32 %v621, 0.0
        %v640 = vmul.f32 %v443, 0.1
        %v641 = vmul.f32 %v444, 0.1
        %v642 = vmul.f32 %v445, 0.1
        %v643 = vmul.f32 %v446, 0.1
        %v644 = vmul.f32 %v447, 0.1
        %v645 = vmul.f32 %v448, 0.1
        %v646 = vmul.f32 %v449, 0.1
        %v647 = vmul.f32 %v450, 0.1
        %v648 = vmul.f32 %v451, 0.1
        %v649 = vmul.f32 %v452, 0.1
        %v650 = vmul.f32 %v453, 0.1
        %v651 = vmul.f32 %v454, 0.1
        %v652 = vmul.f32 %v455, 0.1
        %v653 = vmul.f32 %v456, 0.1
        %v654 = vmul.f32 %v457, 0.1
        %v655 = vmul.f32 %v458, 0.1
        %v656 = vadd.f32 %v624, %v640
        %v657 = vadd.f32 %v625, %v641
        %v658 = vadd.f32 %v626, %v642
        %v659 = vadd.f32 %v627, %v643
        %v660 = vadd.f32 %v628, %v644
        %v661 = vadd.f32 %v629, %v645
        %v662 = vadd.f32 %v630, %v646
        %v663 = vadd.f32 %v631, %v647
        %v664 = vadd.f32 %v632, %v648
        %v665 = vadd.f32 %v633, %v649
        %v666 = vadd.f32 %v634, %v650
        %v667 = vadd.f32 %v635, %v651
        %v668 = vadd.f32 %v636, %v652
        %v669 = vadd.f32 %v637, %v653
        %v670 = vadd.f32 %v638, %v654
        %v671 = vadd.f32 %v639, %v655
        %v672 = vld [vmem:[%s3] sm:$0xff]
        %v673 = vld [vmem:[%s3 + $0x8] sm:$0xff]
        %v674 = vld [vmem:[%s3 + $0x10] sm:$0xff]
        %v675 = vld [vmem:[%s3 + $0x18] sm:$0xff]
        %v676 = vld [vmem:[%s3 + $0x20] sm:$0xff]
        %v677 = vld [vmem:[%s3 + $0x28] sm:$0xff]
        %v678 = vld [vmem:[%s3 + $0x30] sm:$0xff]
        %v679 = vld [vmem:[%s3 + $0x38] sm:$0xff]
        %v680 = vld [vmem:[%s3 + $0x40] sm:$0xff]
        %v681 = vld [vmem:[%s3 + $0x48] sm:$0xff]
        %v682 = vld [vmem:[%s3 + $0x50] sm:$0xff]
        %v683 = vld [vmem:[%s3 + $0x58] sm:$0xff]
        %v684 = vld [vmem:[%s3 + $0x60] sm:$0xff]
        %v685 = vld [vmem:[%s3 + $0x68] sm:$0xff]
        %v686 = vld [vmem:[%s3 + $0x70] sm:$0xff]
        %v687 = vld [vmem:[%s3 + $0x78] sm:$0xff]
        %v688 = vlaneseq
        %v689 = vshrl.u32 %v688, 7
        %v690 = vsub.s32 2, %v689
        %v691 = vrot.slane %v224, %v690
        %692 = vmatprep.subr.mxu0 0.0
        %693 = vmatpush1.msra.mxu0 %v672
        %694 = vmatprep.subr.mxu0 0.0
        %695 = vmatpush1.msra.mxu0 %v673
        %696 = vmatprep.subr.mxu0 0.0
        %697 = vmatpush1.msra.mxu0 %v674
        %698 = vmatprep.subr.mxu0 0.0
        %699 = vmatpush1.msra.mxu0 %v675
        %700 = vmatprep.subr.mxu0 0.0
        %701 = vmatpush1.msra.mxu0 %v676
        %702 = vmatprep.subr.mxu0 0.0
        %703 = vmatpush1.msra.mxu0 %v677
        %704 = vmatprep.subr.mxu0 0.0
        %705 = vmatpush1.msra.mxu0 %v678
        %706 = vmatprep.subr.mxu0 0.0
        %707 = vmatpush1.msra.mxu0 %v679
        %708 = vmatprep.subr.mxu0 0.0
        %709 = vmatpush1.msra.mxu0 %v680
        %710 = vmatprep.subr.mxu0 0.0
        %711 = vmatpush1.msra.mxu0 %v681
        %712 = vmatprep.subr.mxu0 0.0
        %713 = vmatpush1.msra.mxu0 %v682
        %714 = vmatprep.subr.mxu0 0.0
        %715 = vmatpush1.msra.mxu0 %v683
        %716 = vmatprep.subr.mxu0 0.0
        %717 = vmatpush1.msra.mxu0 %v684
        %718 = vmatprep.subr.mxu0 0.0
        %719 = vmatpush1.msra.mxu0 %v685
        %720 = vmatprep.subr.mxu0 0.0
        %721 = vmatpush1.msra.mxu0 %v686
        %722 = vmatprep.subr.mxu0 0.0
        %723 = vmatpush1.msra.mxu0 %v687
        %724 = vmatprep.subr.mxu0 0.0
        %725 = vmatpush1.msra.mxu0 0.0
        %726 = vmatprep.subr.mxu0 0.0
        %727 = vmatpush1.msra.mxu0 0.0
        %728 = vmatprep.subr.mxu0 0.0
        %729 = vmatpush1.msra.mxu0 0.0
        %730 = vmatprep.subr.mxu0 0.0
        %731 = vmatpush1.msra.mxu0 0.0
        %732 = vmatprep.subr.mxu0 0.0
        %733 = vmatpush1.msra.mxu0 0.0
        %734 = vmatprep.subr.mxu0 0.0
        %735 = vmatpush1.msra.mxu0 0.0
        %736 = vmatprep.subr.mxu0 0.0
        %737 = vmatpush1.msra.mxu0 0.0
        %738 = vmatprep.subr.mxu0 0.0
        %739 = vmatpush1.msra.mxu0 0.0
        %740 = vmatprep.subr.mxu0 0.0
        %741 = vmatpush1.msra.mxu0 0.0
        %742 = vmatprep.subr.mxu0 0.0
        %743 = vmatpush1.msra.mxu0 0.0
        %744 = vmatprep.subr.mxu0 0.0
        %745 = vmatpush1.msra.mxu0 0.0
        %746 = vmatprep.subr.mxu0 0.0
        %747 = vmatpush1.msra.mxu0 0.0
        %748 = vmatprep.subr.mxu0 0.0
        %749 = vmatpush1.msra.mxu0 0.0
        %750 = vmatprep.subr.mxu0 0.0
        %751 = vmatpush1.msra.mxu0 0.0
        %752 = vmatprep.subr.mxu0 0.0
        %753 = vmatpush1.msra.mxu0 0.0
        %754 = vmatprep.subr.mxu0 0.0
        %755 = vmatpush1.msra.mxu0 0.0
        %756 = vmatprep.mubr.f32.mxu0 0.0
        %757 = vmatmul.mubr.f32.gmra.mrb[0].mxu0 %v656
        %v758 = vpop.f32.mrb[0].mxu0
        %v759 = vadd.f32 %v691, %v758
        %v760 = vpop.f32.mrb[0].mxu0
        %761 = vmatprep.mubr.f32.mxu0 0.0
        %762 = vmatmul.mubr.f32.gmra.mrb[0].mxu0 %v657
        %v763 = vpop.f32.mrb[0].mxu0
        %v764 = vadd.f32 %v691, %v763
        %v765 = vpop.f32.mrb[0].mxu0
        %766 = vmatprep.mubr.f32.mxu0 0.0
        %767 = vmatmul.mubr.f32.gmra.mrb[0].mxu0 %v658
        %v768 = vpop.f32.mrb[0].mxu0
        %v769 = vadd.f32 %v691, %v768
        %v770 = vpop.f32.mrb[0].mxu0
        %771 = vmatprep.mubr.f32.mxu0 0.0
        %772 = vmatmul.mubr.f32.gmra.mrb[0].mxu0 %v659
        %v773 = vpop.f32.mrb[0].mxu0
        %v774 = vadd.f32 %v691, %v773
        %v775 = vpop.f32.mrb[0].mxu0
        %776 = vmatprep.mubr.f32.mxu0 0.0
        %777 = vmatmul.mubr.f32.gmra.mrb[0].mxu0 %v660
        %v778 = vpop.f32.mrb[0].mxu0
        %v779 = vadd.f32 %v691, %v778
        %v780 = vpop.f32.mrb[0].mxu0
        %781 = vmatprep.mubr.f32.mxu0 0.0
        %782 = vmatmul.mubr.f32.gmra.mrb[0].mxu0 %v661
        %v783 = vpop.f32.mrb[0].mxu0
        %v784 = vadd.f32 %v691, %v783
        %v785 = vpop.f32.mrb[0].mxu0
        %786 = vmatprep.mubr.f32.mxu0 0.0
        %787 = vmatmul.mubr.f32.gmra.mrb[0].mxu0 %v662
        %v788 = vpop.f32.mrb[0].mxu0
        %v789 = vadd.f32 %v691, %v788
        %v790 = vpop.f32.mrb[0].mxu0
        %791 = vmatprep.mubr.f32.mxu0 0.0
        %792 = vmatmul.mubr.f32.gmra.mrb[0].mxu0 %v663
        %v793 = vpop.f32.mrb[0].mxu0
        %v794 = vadd.f32 %v691, %v793
        %v795 = vpop.f32.mrb[0].mxu0
        %796 = vmatprep.mubr.f32.mxu0 0.0
        %797 = vmatmul.mubr.f32.gmra.mrb[0].mxu0 %v664
        %v798 = vpop.f32.mrb[0].mxu0
        %v799 = vadd.f32 %v691, %v798
        %v800 = vpop.f32.mrb[0].mxu0
        %801 = vmatprep.mubr.f32.mxu0 0.0
        %802 = vmatmul.mubr.f32.gmra.mrb[0].mxu0 %v665
        %v803 = vpop.f32.mrb[0].mxu0
        %v804 = vadd.f32 %v691, %v803
        %v805 = vpop.f32.mrb[0].mxu0
        %806 = vmatprep.mubr.f32.mxu0 0.0
        %807 = vmatmul.mubr.f32.gmra.mrb[0].mxu0 %v666
        %v808 = vpop.f32.mrb[0].mxu0
        %v809 = vadd.f32 %v691, %v808
        %v810 = vpop.f32.mrb[0].mxu0
        %811 = vmatprep.mubr.f32.mxu0 0.0
        %812 = vmatmul.mubr.f32.gmra.mrb[0].mxu0 %v667
        %v813 = vpop.f32.mrb[0].mxu0
        %v814 = vadd.f32 %v691, %v813
        %v815 = vpop.f32.mrb[0].mxu0
        %816 = vmatprep.mubr.f32.mxu0 0.0
        %817 = vmatmul.mubr.f32.gmra.mrb[0].mxu0 %v668
        %v818 = vpop.f32.mrb[0].mxu0
        %v819 = vadd.f32 %v691, %v818
        %v820 = vpop.f32.mrb[0].mxu0
        %821 = vmatprep.mubr.f32.mxu0 0.0
        %822 = vmatmul.mubr.f32.gmra.mrb[0].mxu0 %v669
        %v823 = vpop.f32.mrb[0].mxu0
        %v824 = vadd.f32 %v691, %v823
        %v825 = vpop.f32.mrb[0].mxu0
        %826 = vmatprep.mubr.f32.mxu0 0.0
        %827 = vmatmul.mubr.f32.gmra.mrb[0].mxu0 %v670
        %v828 = vpop.f32.mrb[0].mxu0
        %v829 = vadd.f32 %v691, %v828
        %v830 = vpop.f32.mrb[0].mxu0
        %831 = vmatprep.mubr.f32.mxu0 0.0
        %832 = vmatmul.mubr.f32.gmra.mrb[0].mxu0 %v671
        %v833 = vpop.f32.mrb[0].mxu0
        %v834 = vadd.f32 %v691, %v833
        %v835 = vpop.f32.mrb[0].mxu0
        %836 = vdwg.mxu0
        %v837 = vmax.f32 %v759, 0.0
        %v838 = vmax.f32 %v764, 0.0
        %v839 = vmax.f32 %v769, 0.0
        %v840 = vmax.f32 %v774, 0.0
        %v841 = vmax.f32 %v779, 0.0
        %v842 = vmax.f32 %v784, 0.0
        %v843 = vmax.f32 %v789, 0.0
        %v844 = vmax.f32 %v794, 0.0
        %v845 = vmax.f32 %v799, 0.0
        %v846 = vmax.f32 %v804, 0.0
        %v847 = vmax.f32 %v809, 0.0
        %v848 = vmax.f32 %v814, 0.0
        %v849 = vmax.f32 %v819, 0.0
        %v850 = vmax.f32 %v824, 0.0
        %v851 = vmax.f32 %v829, 0.0
        %v852 = vmax.f32 %v834, 0.0
        %v853 = vmul.f32 %v656, 0.1
        %v854 = vmul.f32 %v657, 0.1
        %v855 = vmul.f32 %v658, 0.1
        %v856 = vmul.f32 %v659, 0.1
        %v857 = vmul.f32 %v660, 0.1
        %v858 = vmul.f32 %v661, 0.1
        %v859 = vmul.f32 %v662, 0.1
        %v860 = vmul.f32 %v663, 0.1
        %v861 = vmul.f32 %v664, 0.1
        %v862 = vmul.f32 %v665, 0.1
        %v863 = vmul.f32 %v666, 0.1
        %v864 = vmul.f32 %v667, 0.1
        %v865 = vmul.f32 %v668, 0.1
        %v866 = vmul.f32 %v669, 0.1
        %v867 = vmul.f32 %v670, 0.1
        %v868 = vmul.f32 %v671, 0.1
        %v869 = vadd.f32 %v837, %v853
        %v870 = vadd.f32 %v838, %v854
        %v871 = vadd.f32 %v839, %v855
        %v872 = vadd.f32 %v840, %v856
        %v873 = vadd.f32 %v841, %v857
        %v874 = vadd.f32 %v842, %v858
        %v875 = vadd.f32 %v843, %v859
        %v876 = vadd.f32 %v844, %v860
        %v877 = vadd.f32 %v845, %v861
        %v878 = vadd.f32 %v846, %v862
        %v879 = vadd.f32 %v847, %v863
        %v880 = vadd.f32 %v848, %v864
        %v881 = vadd.f32 %v849, %v865
        %v882 = vadd.f32 %v850, %v866
        %v883 = vadd.f32 %v851, %v867
        %v884 = vadd.f32 %v852, %v868
        %v885 = vlaneseq
        %v886 = vshrl.u32 %v885, 7
        %v887 = vsub.s32 3, %v886
        %v888 = vrot.slane %v224, %v887
        %v889 = vmul.f32 %v869, %v888
        %v890 = vmul.f32 %v870, %v888
        %v891 = vmul.f32 %v871, %v888
        %v892 = vmul.f32 %v872, %v888
        %v893 = vmul.f32 %v873, %v888
        %v894 = vmul.f32 %v874, %v888
        %v895 = vmul.f32 %v875, %v888
        %v896 = vmul.f32 %v876, %v888
        %v897 = vmul.f32 %v877, %v888
        %v898 = vmul.f32 %v878, %v888
        %v899 = vmul.f32 %v879, %v888
        %v900 = vmul.f32 %v880, %v888
        %v901 = vmul.f32 %v881, %v888
        %v902 = vmul.f32 %v882, %v888
        %v903 = vmul.f32 %v883, %v888
        %v904 = vmul.f32 %v884, %v888
        %905 = vadd.xlane.f32.xlu0 %v889
        %v906 = vpop.xlane.xlu0 %905
        %907 = vadd.xlane.f32.xlu0 %v890
        %v908 = vpop.xlane.xlu0 %907
        %909 = vadd.xlane.f32.xlu0 %v891
        %v910 = vpop.xlane.xlu0 %909
        %911 = vadd.xlane.f32.xlu0 %v892
        %v912 = vpop.xlane.xlu0 %911
        %913 = vadd.xlane.f32.xlu0 %v893
        %v914 = vpop.xlane.xlu0 %913
        %915 = vadd.xlane.f32.xlu0 %v894
        %v916 = vpop.xlane.xlu0 %915
        %917 = vadd.xlane.f32.xlu0 %v895
        %v918 = vpop.xlane.xlu0 %917
        %919 = vadd.xlane.f32.xlu0 %v896
        %v920 = vpop.xlane.xlu0 %919
        %921 = vadd.xlane.f32.xlu0 %v897
        %v922 = vpop.xlane.xlu0 %921
        %923 = vadd.xlane.f32.xlu0 %v898
        %v924 = vpop.xlane.xlu0 %923
        %925 = vadd.xlane.f32.xlu0 %v899
        %v926 = vpop.xlane.xlu0 %925
        %927 = vadd.xlane.f32.xlu0 %v900
        %v928 = vpop.xlane.xlu0 %927
        %929 = vadd.xlane.f32.xlu0 %v901
        %v930 = vpop.xlane.xlu0 %929
        %931 = vadd.xlane.f32.xlu0 %v902
        %v932 = vpop.xlane.xlu0 %931
        %933 = vadd.xlane.f32.xlu0 %v903
        %v934 = vpop.xlane.xlu0 %933
        %935 = vadd.xlane.f32.xlu0 %v904
        %v936 = vpop.xlane.xlu0 %935
        %938 = vset.pattern.permute.xlu0 0
        %939 = vperm.xlu0 %938, %v224
        %v940 = vpop.permute.xlu0 %939
        %v941 = vlaneseq
        %v942 = vshrl.u32 %v941, 7
        %v943 = vsub.s32 4, %v942
        %v944 = vrot.slane %v940, %v943
        %v946 = vadd.f32 %v906, %v944
        %v947 = vadd.f32 %v908, %v944
        %v948 = vadd.f32 %v910, %v944
        %v949 = vadd.f32 %v912, %v944
        %v950 = vadd.f32 %v914, %v944
        %v951 = vadd.f32 %v916, %v944
        %v952 = vadd.f32 %v918, %v944
        %v953 = vadd.f32 %v920, %v944
        %v954 = vadd.f32 %v922, %v944
        %v955 = vadd.f32 %v924, %v944
        %v956 = vadd.f32 %v926, %v944
        %v957 = vadd.f32 %v928, %v944
        %v958 = vadd.f32 %v930, %v944
        %v959 = vadd.f32 %v932, %v944
        %v960 = vadd.f32 %v934, %v944
        %v961 = vadd.f32 %v936, %v944
        %978 = vset.pattern.permute.xlu0 0
        %979 = vperm.xlu0 %978, %v946
        %v980 = vpop.permute.xlu0 %979
        %981 = vset.pattern.permute.xlu0 0
        %982 = vperm.xlu0 %981, %v947
        %v983 = vpop.permute.xlu0 %982
        %984 = vset.pattern.permute.xlu0 0
        %985 = vperm.xlu0 %984, %v948
        %v986 = vpop.permute.xlu0 %985
        %987 = vset.pattern.permute.xlu0 0
        %988 = vperm.xlu0 %987, %v949
        %v989 = vpop.permute.xlu0 %988
        %990 = vset.pattern.permute.xlu0 0
        %991 = vperm.xlu0 %990, %v950
        %v992 = vpop.permute.xlu0 %991
        %993 = vset.pattern.permute.xlu0 0
        %994 = vperm.xlu0 %993, %v951
        %v995 = vpop.permute.xlu0 %994
        %996 = vset.pattern.permute.xlu0 0
        %997 = vperm.xlu0 %996, %v952
        %v998 = vpop.permute.xlu0 %997
        %999 = vset.pattern.permute.xlu0 0
        %1000 = vperm.xlu0 %999, %v953
        %v1001 = vpop.permute.xlu0 %1000
        %1002 = vset.pattern.permute.xlu0 0
        %1003 = vperm.xlu0 %1002, %v954
        %v1004 = vpop.permute.xlu0 %1003
        %1005 = vset.pattern.permute.xlu0 0
        %1006 = vperm.xlu0 %1005, %v955
        %v1007 = vpop.permute.xlu0 %1006
        %1008 = vset.pattern.permute.xlu0 0
        %1009 = vperm.xlu0 %1008, %v956
        %v1010 = vpop.permute.xlu0 %1009
        %1011 = vset.pattern.permute.xlu0 0
        %1012 = vperm.xlu0 %1011, %v957
        %v1013 = vpop.permute.xlu0 %1012
        %1014 = vset.pattern.permute.xlu0 0
        %1015 = vperm.xlu0 %1014, %v958
        %v1016 = vpop.permute.xlu0 %1015
        %1017 = vset.pattern.permute.xlu0 0
        %1018 = vperm.xlu0 %1017, %v959
        %v1019 = vpop.permute.xlu0 %1018
        %1020 = vset.pattern.permute.xlu0 0
        %1021 = vperm.xlu0 %1020, %v960
        %v1022 = vpop.permute.xlu0 %1021
        %1023 = vset.pattern.permute.xlu0 0
        %1024 = vperm.xlu0 %1023, %v961
        %v1025 = vpop.permute.xlu0 %1024
        %v1026 = vlaneseq
        %v1027 = vand.u32 %v1026, 127
        %v1028 = vlaneseq
        %v1029 = vshrl.u32 %v1028, 7
        %v1030 = vsub.s32 %v1027, %v1029
        %v1031 = vrot.slane %v980, %v1030
        %v1032 = vadd.s32 %v1027, 4294967288
        %v1033 = vlaneseq
        %v1034 = vshrl.u32 %v1033, 7
        %v1035 = vsub.s32 %v1032, %v1034
        %v1036 = vrot.slane %v983, %v1035
        %vm1037 = vcmask 130112
        %v1038 = vsel %vm1037, %v1036, %v1031
        %v1039 = vadd.s32 %v1027, 4294967280
        %v1040 = vlaneseq
        %v1041 = vshrl.u32 %v1040, 7
        %v1042 = vsub.s32 %v1039, %v1041
        %v1043 = vrot.slane %v986, %v1042
        %vm1044 = vcmask 195712
        %v1045 = vsel %vm1044, %v1043, %v1038
        %v1046 = vadd.s32 %v1027, 4294967272
        %v1047 = vlaneseq
        %v1048 = vshrl.u32 %v1047, 7
        %v1049 = vsub.s32 %v1046, %v1048
        %v1050 = vrot.slane %v989, %v1049
        %vm1051 = vcmask 261312
        %v1052 = vsel %vm1051, %v1050, %v1045
        %v1053 = vadd.s32 %v1027, 4294967264
        %v1054 = vlaneseq
        %v1055 = vshrl.u32 %v1054, 7
        %v1056 = vsub.s32 %v1053, %v1055
        %v1057 = vrot.slane %v992, %v1056
        %vm1058 = vcmask 326912
        %v1059 = vsel %vm1058, %v1057, %v1052
        %v1060 = vadd.s32 %v1027, 4294967256
        %v1061 = vlaneseq
        %v1062 = vshrl.u32 %v1061, 7
        %v1063 = vsub.s32 %v1060, %v1062
        %v1064 = vrot.slane %v995, %v1063
        %vm1065 = vcmask 392512
        %v1066 = vsel %vm1065, %v1064, %v1059
        %v1067 = vadd.s32 %v1027, 4294967248
        %v1068 = vlaneseq
        %v1069 = vshrl.u32 %v1068, 7
        %v1070 = vsub.s32 %v1067, %v1069
        %v1071 = vrot.slane %v998, %v1070
        %vm1072 = vcmask 458112
        %v1073 = vsel %vm1072, %v1071, %v1066
        %v1074 = vadd.s32 %v1027, 4294967240
        %v1075 = vlaneseq
        %v1076 = vshrl.u32 %v1075, 7
        %v1077 = vsub.s32 %v1074, %v1076
        %v1078 = vrot.slane %v1001, %v1077
        %vm1079 = vcmask 523712
        %v1080 = vsel %vm1079, %v1078, %v1073
        %v1081 = vadd.s32 %v1027, 4294967232
        %v1082 = vlaneseq
        %v1083 = vshrl.u32 %v1082, 7
        %v1084 = vsub.s32 %v1081, %v1083
        %v1085 = vrot.slane %v1004, %v1084
        %vm1086 = vcmask 589312
        %v1087 = vsel %vm1086, %v1085, %v1080
        %v1088 = vadd.s32 %v1027, 4294967224
        %v1089 = vlaneseq
        %v1090 = vshrl.u32 %v1089, 7
        %v1091 = vsub.s32 %v1088, %v1090
        %v1092 = vrot.slane %v1007, %v1091
        %vm1093 = vcmask 654912
        %v1094 = vsel %vm1093, %v1092, %v1087
        %v1095 = vadd.s32 %v1027, 4294967216
        %v1096 = vlaneseq
        %v1097 = vshrl.u32 %v1096, 7
        %v1098 = vsub.s32 %v1095, %v1097
        %v1099 = vrot.slane %v1010, %v1098
        %vm1100 = vcmask 720512
        %v1101 = vsel %vm1100, %v1099, %v1094
        %v1102 = vadd.s32 %v1027, 4294967208
        %v1103 = vlaneseq
        %v1104 = vshrl.u32 %v1103, 7
        %v1105 = vsub.s32 %v1102, %v1104
        %v1106 = vrot.slane %v1013, %v1105
        %vm1107 = vcmask 786112
        %v1108 = vsel %vm1107, %v1106, %v1101
        %v1109 = vadd.s32 %v1027, 4294967200
        %v1110 = vlaneseq
        %v1111 = vshrl.u32 %v1110, 7
        %v1112 = vsub.s32 %v1109, %v1111
        %v1113 = vrot.slane %v1016, %v1112
        %vm1114 = vcmask 851712
        %v1115 = vsel %vm1114, %v1113, %v1108
        %v1116 = vadd.s32 %v1027, 4294967192
        %v1117 = vlaneseq
        %v1118 = vshrl.u32 %v1117, 7
        %v1119 = vsub.s32 %v1116, %v1118
        %v1120 = vrot.slane %v1019, %v1119
        %vm1121 = vcmask 917312
        %v1122 = vsel %vm1121, %v1120, %v1115
        %v1123 = vadd.s32 %v1027, 4294967184
        %v1124 = vlaneseq
        %v1125 = vshrl.u32 %v1124, 7
        %v1126 = vsub.s32 %v1123, %v1125
        %v1127 = vrot.slane %v1022, %v1126
        %vm1128 = vcmask 982912
        %v1129 = vsel %vm1128, %v1127, %v1122
        %v1130 = vadd.s32 %v1027, 4294967176
        %v1131 = vlaneseq
        %v1132 = vshrl.u32 %v1131, 7
        %v1133 = vsub.s32 %v1130, %v1132
        %v1134 = vrot.slane %v1025, %v1133
        %vm1135 = vcmask 1048512
        %v1136 = vsel %vm1135, %v1134, %v1129
        %1138 = vst [vmem:[%s217] sm:$0x1] %v1136
        %s1139 = sand.u32 %s137, 1
        %s1140 = scalar_lea.sflag [#allocation3], %s1139
        %s1141 = sand.u32 %s137, 1
        %s1142 = scalar_lea.vmem [#allocation2], %s1141
        // Predicated region
        $region41: #{tpu_custom_call.1} parent=39 // pred_check
          %p1143 = pneg %p147
        $region42: #{tpu_custom_call.1} parent=39 // pred_check_branch
          %1145 = sbr.rel (%p1143) target = $region44
        $region43: #{tpu_custom_call.1} parent=39 // pred_region
          %s1147 = ssub.s32 16, 16
          %1148 = vsyncadd %s1140, %s1147
          %s1149 = smul.addr %s19, 16
          %s1150 = scalar_lea.hbm %s5, %s1149
          %s1152 = sshll.u32 %s1142, 4
          %s1153 = int_to_ptr.vmem [resolvable:$true] %s1152
          %1155 = dma.vmem_to_hbm [thread:$0]  %s1153, 16, %s1150, %s1140
        $region44: #{tpu_custom_call.1} parent=39 // pred_fallthru
          _
      $region40: #{tpu_custom_call.1} parent=5 // pred_fallthru
        _
      %p1156 = scmp.le.s32.totalorder 2, %s14
      // Predicated region
      $region45: #{tpu_custom_call.1} parent=5 // pred_check
        %p1157 = pneg %p1156
      $region46: #{tpu_custom_call.1} parent=5 // pred_check_branch
        %1159 = sbr.rel (%p1157) target = $region48
      $region47: #{tpu_custom_call.1} parent=5 // pred_region
        %s1160 = ssub.s32 %s14, 2
        // Predicated region
        $region49: #{tpu_custom_call.1} parent=47 // pred_check
          %p1161 = pneg %p153
        $region50: #{tpu_custom_call.1} parent=47 // pred_check_branch
          %1163 = sbr.rel (%p1161) target = $region52
        $region51: #{tpu_custom_call.1} parent=47 // pred_region
          %s1164 = sand.u32 %s138, 1
          %s1165 = scalar_lea.sflag [#allocation3], %s1164
          %s1166 = sand.u32 %s138, 1
          %s1167 = scalar_lea.vmem [#allocation2], %s1166
          %1168 = dma.done %s1165, 16
        $region52: #{tpu_custom_call.1} parent=47 // pred_fallthru
          _
      $region48: #{tpu_custom_call.1} parent=5 // pred_fallthru
        _
    $region6: #{tpu_custom_call.1} parent=1 // loop_footer
      %s18 = sadd.s32 1, %s14
    $region7: #{tpu_custom_call.1} parent=1 // loop_footer_branch
      %13 = sbr.rel target = $region3
    $region8: #{tpu_custom_call.1} parent=1 // loop_exit
      _
    %1169 = vsyncpa [#allocation3], 1
    %s1170 = scalar_lea.sflag [#allocation3], 1
    %1171 = vsyncpa %s1170, 1

</llo_original>
